<compile_context>
chip_gen: v5e
topology: v5e:2x2
jax: 0.10.0
libtpu: 0.0.40
codegen_flags: <defaults>
</compile_context>

<pallas_src>
import jax
import jax.numpy as jnp
from jax.experimental import pallas as pl
from jax.experimental.pallas import tpu as pltpu


def _conv1x1_kernel(w2s_ref, b2_ref, xs_ref, out_ref):
    # w2s_ref: (Hid, C)   per-batch, scale-folded conv weight (resident across s)
    # b2_ref : (Hid, 1)   conv bias (broadcast along lanes, resident always)
    # xs_ref : (C, tS)    spatial tile of x (NCHW, H*W flattened on the lane axis)
    # out_ref: (Hid, tS)  lane-dense output tile
    acc = jnp.dot(w2s_ref[...], xs_ref[...], preferred_element_type=jnp.float32)
    acc = acc + b2_ref[...].astype(jnp.float32)
    out_ref[...] = acc.astype(out_ref.dtype)


def _choose_spatial_tile(S, C, hidden, itemsize, vmem_budget_bytes=16 * 1024 * 1024):
    """Largest multiple-of-128 divisor of S whose double-buffered streaming
    footprint (x tile in + out tile out) fits the VMEM budget; falls back to S
    (full-extent block, always legal)."""
    per_col = 2 * (C + hidden) * itemsize            # double-buffered in + out, per lane column
    cap = max(128, vmem_budget_bytes // max(per_col, 1))
    # Bigger tiles -> fewer grid steps, denser unmasked stores, closer to the
    # HBM roofline; 8192 lanes is plenty to amortize the ~0.35 us/step overhead.
    cap = min(cap, 8192, S)
    best = None
    t = 128
    while t <= cap:
        if S % t == 0:
            best = t
        t += 128
    return best if best is not None else S


def reparameterize_forward(x, params, pool_size, matmul_dtype=None):
    """x: (B, C, H, W) float32 (NCHW, matching PyTorch). Returns (B, Hid, H, W).

    matmul_dtype: optionally cast the matmul operands (e.g. jnp.bfloat16 on
    v6e/v7x to halve HBM read traffic) while accumulating in float32. Default
    keeps x.dtype (exact f32 here so the demo matches the reference tightly).
    """
    B, C, H, W = x.shape
    P = pool_size
    assert H % P == 0 and W % P == 0, "adaptive pooling implemented for exact bins"
    hb, wb = H // P, W // P
    S = H * W
    hidden = params["w2_w"].shape[0]

    # ---- tiny attention path in plain JAX (O(B*C*P*P) outputs, fused reductions) ----
    xr = x.reshape(B, C, P, hb, P, wb)
    pooled = xr.max(axis=(3, 5)) + xr.mean(axis=(3, 5))                 # (B, C, P, P)
    pooled = pooled.reshape(B, C, P * P)
    logit = pooled @ params["w1_w"].T.astype(x.dtype) + params["w1_b"].astype(x.dtype)
    scale = 1.0 + jax.nn.sigmoid(logit)                                 # (B, C, 1) == 1 + att

    # Fold the per-channel scale into the conv weight: W2 @ (x * s) == (W2 * s) @ x.
    w2 = params["w2_w"].reshape(hidden, C)                              # (Hid, C)
    w2s = w2[None, :, :] * jnp.swapaxes(scale, 1, 2)                    # (B, Hid, C)
    b2 = params["w2_b"].reshape(hidden, 1).astype(jnp.float32)          # (Hid, 1)

    xs = x.reshape(B, C, S)                                             # pure reshape (no transpose)
    compute_dtype = matmul_dtype if matmul_dtype is not None else x.dtype
    xs = xs.astype(compute_dtype)
    w2s = w2s.astype(compute_dtype)
    itemsize = jnp.dtype(compute_dtype).itemsize

    tS = _choose_spatial_tile(S, C, hidden, itemsize)
    grid = (B, S // tS)

    out_itemsize = jnp.dtype(x.dtype).itemsize
    cost = pl.CostEstimate(
        flops=2 * B * hidden * C * S,
        transcendentals=0,
        bytes_accessed=(B * C * S * itemsize            # x read
                        + B * hidden * C * itemsize     # folded weights
                        + B * hidden * S * out_itemsize),  # output write
    )

    out = pl.pallas_call(
        _conv1x1_kernel,
        out_shape=jax.ShapeDtypeStruct((B, hidden, S), x.dtype),
        grid=grid,
        in_specs=[
            pl.BlockSpec((None, hidden, C), lambda b, s: (b, 0, 0)),    # w2s: resident across s
            pl.BlockSpec((hidden, 1), lambda b, s: (0, 0)),             # b2: resident always
            pl.BlockSpec((None, C, tS), lambda b, s: (b, 0, s)),        # x spatial tile
        ],
        out_specs=pl.BlockSpec((None, hidden, tS), lambda b, s: (b, 0, s)),
        compiler_params=pltpu.CompilerParams(
            dimension_semantics=("parallel", "parallel"),
        ),
        cost_estimate=cost,
    )(w2s, b2, xs)

    # NCHW output: just a reshape, no transpose.
    return out.reshape(B, hidden, H, W)


def ref_forward(x, params, pool_size):
    """Pure-JAX reference mirroring the PyTorch forward."""
    B, C, H, W = x.shape
    P = pool_size
    hb, wb = H // P, W // P
    xr = x.reshape(B, C, P, hb, P, wb)
    gmp = xr.max(axis=(3, 5))
    gap = xr.mean(axis=(3, 5))
    pooled = (gmp + gap).reshape(B, C, P * P)
    att = jax.nn.sigmoid(pooled @ params["w1_w"].T + params["w1_b"])    # (B, C, 1)
    att = att[..., None]                                                # (B, C, 1, 1)
    xm = x * att + x
    hidden = params["w2_w"].shape[0]
    w2 = params["w2_w"].reshape(hidden, C)
    return jnp.einsum("bchw,oc->bohw", xm, w2) + params["w2_b"][None, :, None, None]


def init_params(key, input_size, pool_size, hidden_size):
    """Deterministic synthetic parameters with PyTorch-style shapes."""
    k1, k2, k3, k4 = jax.random.split(key, 4)
    pp = pool_size * pool_size
    return {
        "w1_w": jax.random.uniform(k1, (1, pp), jnp.float32, -0.5, 0.5),          # nn.Linear(pp, 1).weight
        "w1_b": jax.random.uniform(k2, (1,), jnp.float32, -0.5, 0.5),             # nn.Linear(pp, 1).bias
        "w2_w": jax.random.uniform(k3, (hidden_size, input_size, 1, 1),
                                   jnp.float32, -0.5, 0.5),                        # Conv2d(C, Hid, 1).weight
        "w2_b": jax.random.uniform(k4, (hidden_size,), jnp.float32, -0.5, 0.5),   # Conv2d(C, Hid, 1).bias
    }


if __name__ == "__main__":
    key = jax.random.PRNGKey(0)

    # Primary small config (matches the module's toy sizes).
    B, C, H, W = 2, 4, 16, 16
    pool_size = 4
    hidden_size = 8
    kx, kp, kx2 = jax.random.split(key, 3)
    x = jax.random.normal(kx, (B, C, H, W), jnp.float32)
    params = init_params(kp, C, pool_size, hidden_size)

    out = reparameterize_forward(x, params, pool_size)
    out = jax.block_until_ready(out)
    ref = ref_forward(x, params, pool_size)
    assert out.shape == (B, hidden_size, H, W)
    assert jnp.allclose(out, ref, atol=1e-4, rtol=1e-4), "mismatch vs reference (16x16)"

    # Second config with a larger spatial extent to exercise the tiled grid
    # (S = 4096 -> tS = 4096, grid = (B, 1); lane-dense unmasked stores).
    H2 = W2 = 64
    x2 = jax.random.normal(kx2, (B, C, H2, W2), jnp.float32)
    out2 = reparameterize_forward(x2, params, pool_size)
    out2 = jax.block_until_ready(out2)
    ref2 = ref_forward(x2, params, pool_size)
    assert out2.shape == (B, hidden_size, H2, W2)
    assert jnp.allclose(out2, ref2, atol=1e-4, rtol=1e-4), "mismatch vs reference (64x64)"

    print("KERNEL_OK")
</pallas_src>

<mosaic_0001>
module attributes {stable_mosaic.version = 11 : i64} {
  func.func @_conv1x1_kernel(%arg0: i32, %arg1: i32, %arg2: memref<1x8x4xf32, #tpu.memory_space<vmem>>, %arg3: memref<8x1xf32, #tpu.memory_space<vmem>>, %arg4: memref<1x4x256xf32, #tpu.memory_space<vmem>>, %arg5: memref<1x8x256xf32, #tpu.memory_space<vmem>>) attributes {dimension_semantics = [#tpu.dimension_semantics<parallel>, #tpu.dimension_semantics<parallel>], iteration_bounds = array<i64: 2, 1>, scalar_prefetch = 0 : i64, scratch_operands = 0 : i64, tpu.core_type = #tpu.core_type<tc>, window_params = [{transform_indices = @transform_0, window_bounds = array<i64: 1, 8, 4>}, {pipeline_mode = #tpu.pipeline_mode<synchronous>, transform_indices = @transform_1, window_bounds = array<i64: 8, 1>}, {transform_indices = @transform_2, window_bounds = array<i64: 1, 4, 256>}, {transform_indices = @transform_3, window_bounds = array<i64: 1, 8, 256>}]} {
    %c0 = arith.constant 0 : index
    %c0_0 = arith.constant 0 : index
    %c0_1 = arith.constant 0 : index
    %0 = vector.load %arg2[%c0, %c0_0, %c0_1] : memref<1x8x4xf32, #tpu.memory_space<vmem>>, vector<1x8x4xf32>
    %1 = vector.shape_cast %0 : vector<1x8x4xf32> to vector<8x4xf32>
    %c0_2 = arith.constant 0 : index
    %c0_3 = arith.constant 0 : index
    %c0_4 = arith.constant 0 : index
    %2 = vector.load %arg4[%c0_2, %c0_3, %c0_4] : memref<1x4x256xf32, #tpu.memory_space<vmem>>, vector<1x4x256xf32>
    %3 = vector.shape_cast %2 : vector<1x4x256xf32> to vector<4x256xf32>
    %cst = arith.constant dense<0.000000e+00> : vector<8x256xf32>
    %4 = tpu.matmul %1, %3, %cst {dimension_numbers = #tpu.dot_dimension_numbers<[1], [0], [0], [1], [0, 0, 1, 1], [], []>} : vector<8x4xf32>, vector<4x256xf32>, vector<8x256xf32> -> vector<8x256xf32>
    %c0_5 = arith.constant 0 : index
    %c0_6 = arith.constant 0 : index
    %5 = vector.load %arg3[%c0_5, %c0_6] : memref<8x1xf32, #tpu.memory_space<vmem>>, vector<8x1xf32>
    %6 = vector.broadcast %5 : vector<8x1xf32> to vector<8x256xf32>
    %7 = arith.addf %4, %6 : vector<8x256xf32>
    %c0_7 = arith.constant 0 : index
    %c0_8 = arith.constant 0 : index
    %c0_9 = arith.constant 0 : index
    %8 = vector.load %arg5[%c0_7, %c0_8, %c0_9] : memref<1x8x256xf32, #tpu.memory_space<vmem>>, vector<1x8x256xf32>
    %9 = vector.shape_cast %8 : vector<1x8x256xf32> to vector<8x256xf32>
    %10 = vector.shape_cast %7 : vector<8x256xf32> to vector<1x8x256xf32>
    tpu.vector_store %arg5[%c0_7, %c0_8, %c0_9], %10 {strides = array<i32>} : memref<1x8x256xf32, #tpu.memory_space<vmem>>, vector<1x8x256xf32>,
    return
  }
  func.func @transform_0(%arg0: i32, %arg1: i32) -> (i32, i32, i32) {
    %c0_i32 = arith.constant 0 : i32
    %c0_i32_0 = arith.constant 0 : i32
    %c0_i32_1 = arith.constant 0 : i32
    return %arg0, %c0_i32, %c0_i32_0 : i32, i32, i32
  }
  func.func @transform_1(%arg0: i32, %arg1: i32) -> (i32, i32) {
    %c0_i32 = arith.constant 0 : i32
    %c0_i32_0 = arith.constant 0 : i32
    %c0_i32_1 = arith.constant 0 : i32
    return %c0_i32, %c0_i32_0 : i32, i32
  }
  func.func @transform_2(%arg0: i32, %arg1: i32) -> (i32, i32, i32) {
    %c0_i32 = arith.constant 0 : i32
    %c0_i32_0 = arith.constant 0 : i32
    return %arg0, %c0_i32, %arg1 : i32, i32, i32
  }
  func.func @transform_3(%arg0: i32, %arg1: i32) -> (i32, i32, i32) {
    %c0_i32 = arith.constant 0 : i32
    %c0_i32_0 = arith.constant 0 : i32
    return %arg0, %c0_i32, %arg1 : i32, i32, i32
  }
}

</mosaic_0001>

<llo_original>
// kernel: tpu_custom_call.1
$region0: #{tpu_custom_call.1}
  #allocation0 [shape = 'u32[]', space=smem, size = 0x4, offset = 0x4, fixed_abs, tag = 'smem constant byte address 0x4 - core index']
  #allocation1 [shape = 'u32[72,128]{1,0:T(1,128)}', space=vmem, size = 0x9000, scoped, tag = 'internal scratch']
  %s0 = inlined_call_operand.vmem [shape: f32[2,8,4], index: 0, kind: input, shape index: {}]
  %s1 = inlined_call_operand.vmem [shape: f32[8,1], index: 1, kind: input, shape index: {}]
  %s2 = inlined_call_operand.vmem [shape: f32[2,4,256], index: 2, kind: input, shape index: {}]
  %s3 = inlined_call_operand.hbm [shape: f32[2,8,256], index: 3, kind: output, shape index: {}]
  %s4 = sld [smem:[#allocation0]]
  $region45: #{tpu_custom_call.1} parent=0
    _
  %s6 = ssub.s32 1, %s4
  %s7 = scalar_select 0, %s6, %s4
  $region1: #{tpu_custom_call.1} parent=0
    #allocation2 [shape = 'u8[16384]{0}', space=vmem, size = 0x4000, scoped, tag = 'output window, operand 0']
    #allocation3 [shape = 's32[2]{0}', space=sflag, size = 0x8, scoped, tag = 'scoped memory for tpu_custom_call.1']
    %8 = vsyncpa [#allocation3], 0
    %s9 = scalar_lea.sflag [#allocation3], 1
    %10 = vsyncpa %s9, 0
    loop: start=0, step=1, limit=4
    $region2: #{tpu_custom_call.1} parent=1 // loop_pre_header
      _
    $region3: #{tpu_custom_call.1} parent=1 // loop_header
      %s12 = sphi 0, %s16
      %p13 = scmp.ge.s32.totalorder %s12, 4
      %s19 = sphi 0, %s31
      %s20 = sphi 0, %s27
      %s21 = sphi 0, %s19
      %s22 = sphi 0, %s20
      %s23 = sphi 0, %s21
      %s24 = sphi 0, %s22
      %s34 = sphi 0, %s36
      %s37 = sphi 0, %s34
      %s38 = sphi 0, %s37
      %s54 = sphi 0, %s38
      %s58 = sphi 0, %s58
      %s60 = sphi 0, %s58
      %s61 = sphi 0, %s60
      %s75 = sphi 0, %s61
      %s83 = sphi 0, %s85
      %s86 = sphi 0, %s83
      %s87 = sphi 0, %s86
      %s103 = sphi 0, %s87
      %s111 = sphi 0, %s113
      %s114 = sphi 0, %s111
      %s115 = sphi 0, %s114
      %s131 = sphi 0, %s115
    $region4: #{tpu_custom_call.1} parent=1 // loop_header_branch
      %15 = sbr.rel (%p13) target = $region8
    $region5: #{tpu_custom_call.1} parent=1 // loop_body
      %s17 = ssub.s32 %s12, 1
      %s18 = ssub.s32 %s12, 2
      %s25 = sadd.s32 1, %s20
      %p26 = scmp.ge.s32.totalorder %s25, 1
      %s27 = scalar_select %p26, 0, %s25
      %s28 = sadd.s32 1, %s19
      %s29 = scalar_select %p26, %s28, %s19
      %p30 = scmp.ge.s32.totalorder %s29, 2
      %s31 = scalar_select %p30, 0, %s29
      %s32 = ssub.s32 %s19, %s31
      %p33 = scmp.eq.s32.totalorder %s32, 0
      %s35 = sadd.s32 %s34, 1
      %s36 = scalar_select %p33, %s34, %s35
      %p39 = pneg %p33
      %p40 = scmp.eq.s32.totalorder %s12, 1
      %p41 = por %p39, %p40
      %p42 = scmp.ne.s32.totalorder %s34, %s37
      %p43 = scmp.eq.s32.totalorder %s12, 0
      %p44 = por %p42, %p43
      %p45 = scmp.ne.s32.totalorder %s34, %s37
      %p46 = scmp.eq.s32.totalorder %s17, 1
      %p47 = por %p45, %p46
      %p48 = scmp.ne.s32.totalorder %s37, %s38
      %p49 = scmp.eq.s32.totalorder %s17, 0
      %p50 = por %p48, %p49
      %p51 = scmp.ne.s32.totalorder %s37, %s38
      %p52 = scmp.eq.s32.totalorder %s18, 1
      %p53 = por %p51, %p52
      %p55 = scmp.ne.s32.totalorder %s38, %s54
      %p56 = scmp.eq.s32.totalorder %s18, 0
      %p57 = por %p55, %p56
      %s59 = sadd.s32 %s58, 1
      %p62 = scmp.eq.s32.totalorder %s12, 1
      %p63 = scmp.ne.s32.totalorder %s58, %s60
      %p64 = scmp.eq.s32.totalorder %s12, 0
      %p65 = por %p63, %p64
      %p66 = scmp.ne.s32.totalorder %s58, %s60
      %p67 = scmp.eq.s32.totalorder %s17, 1
      %p68 = por %p66, %p67
      %p69 = scmp.ne.s32.totalorder %s60, %s61
      %p70 = scmp.eq.s32.totalorder %s17, 0
      %p71 = por %p69, %p70
      %p72 = scmp.ne.s32.totalorder %s60, %s61
      %p73 = scmp.eq.s32.totalorder %s18, 1
      %p74 = por %p72, %p73
      %p76 = scmp.ne.s32.totalorder %s61, %s75
      %p77 = scmp.eq.s32.totalorder %s18, 0
      %p78 = por %p76, %p77
      %s79 = ssub.s32 %s19, %s31
      %s80 = ssub.s32 %s20, %s27
      %s81 = sor.u32 %s79, %s80
      %p82 = scmp.eq.s32.totalorder %s81, 0
      %s84 = sadd.s32 %s83, 1
      %s85 = scalar_select %p82, %s83, %s84
      %p88 = pneg %p82
      %p89 = scmp.eq.s32.totalorder %s12, 1
      %p90 = por %p88, %p89
      %p91 = scmp.ne.s32.totalorder %s83, %s86
      %p92 = scmp.eq.s32.totalorder %s12, 0
      %p93 = por %p91, %p92
      %p94 = scmp.ne.s32.totalorder %s83, %s86
      %p95 = scmp.eq.s32.totalorder %s17, 1
      %p96 = por %p94, %p95
      %p97 = scmp.ne.s32.totalorder %s86, %s87
      %p98 = scmp.eq.s32.totalorder %s17, 0
      %p99 = por %p97, %p98
      %p100 = scmp.ne.s32.totalorder %s86, %s87
      %p101 = scmp.eq.s32.totalorder %s18, 1
      %p102 = por %p100, %p101
      %p104 = scmp.ne.s32.totalorder %s87, %s103
      %p105 = scmp.eq.s32.totalorder %s18, 0
      %p106 = por %p104, %p105
      %s107 = ssub.s32 %s19, %s31
      %s108 = ssub.s32 %s20, %s27
      %s109 = sor.u32 %s107, %s108
      %p110 = scmp.eq.s32.totalorder %s109, 0
      %s112 = sadd.s32 %s111, 1
      %s113 = scalar_select %p110, %s111, %s112
      %p116 = pneg %p110
      %p117 = scmp.eq.s32.totalorder %s12, 1
      %p118 = por %p116, %p117
      %p119 = scmp.ne.s32.totalorder %s111, %s114
      %p120 = scmp.eq.s32.totalorder %s12, 0
      %p121 = por %p119, %p120
      %p122 = scmp.ne.s32.totalorder %s111, %s114
      %p123 = scmp.eq.s32.totalorder %s17, 1
      %p124 = por %p122, %p123
      %p125 = scmp.ne.s32.totalorder %s114, %s115
      %p126 = scmp.eq.s32.totalorder %s17, 0
      %p127 = por %p125, %p126
      %p128 = scmp.ne.s32.totalorder %s114, %s115
      %p129 = scmp.eq.s32.totalorder %s18, 1
      %p130 = por %p128, %p129
      %p132 = scmp.ne.s32.totalorder %s115, %s131
      %p133 = scmp.eq.s32.totalorder %s18, 0
      %p134 = por %p132, %p133
      %p135 = scmp.le.s32.totalorder 1, %s12
      %p136 = scmp.lt.s32.totalorder %s12, 3
      %p137 = pnand %p135, %p136
      %p138 = pneg %p137
      // Predicated region
      $region9: #{tpu_custom_call.1} parent=5 // pred_check
        _
      $region10: #{tpu_custom_call.1} parent=5 // pred_check_branch
        %140 = sbr.rel (%p137) target = $region12
      $region11: #{tpu_custom_call.1} parent=5 // pred_region
        %s141 = ssub.s32 %s12, 1
        // Predicated region
        $region13: #{tpu_custom_call.1} parent=11 // pred_check
          %p142 = pneg %p71
        $region14: #{tpu_custom_call.1} parent=11 // pred_check_branch
          %144 = sbr.rel (%p142) target = $region16
        $region15: #{tpu_custom_call.1} parent=11 // pred_region
          _
        $region16: #{tpu_custom_call.1} parent=11 // pred_fallthru
          _
      $region12: #{tpu_custom_call.1} parent=5 // pred_fallthru
        _
      %p145 = scmp.lt.s32.totalorder %s12, 2
      // Predicated region
      $region17: #{tpu_custom_call.1} parent=5 // pred_check
        %p146 = pneg %p145
      $region18: #{tpu_custom_call.1} parent=5 // pred_check_branch
        %148 = sbr.rel (%p146) target = $region20
      $region19: #{tpu_custom_call.1} parent=5 // pred_region
        // Predicated region
        $region21: #{tpu_custom_call.1} parent=19 // pred_check
          %p149 = pneg %p44
        $region22: #{tpu_custom_call.1} parent=19 // pred_check_branch
          %151 = sbr.rel (%p149) target = $region24
        $region23: #{tpu_custom_call.1} parent=19 // pred_region
          %p152 = scmp.lt.s32.totalorder %s19, 1
          %s153 = scalar_select %p152, %s19, 1
          %s154 = smul.addr %s153, 8
          %s155 = scalar_lea.vmem %s0, %s154
        $region24: #{tpu_custom_call.1} parent=19 // pred_fallthru
          _
        // Predicated region
        $region25: #{tpu_custom_call.1} parent=19 // pred_check
          %p156 = pneg %p93
        $region26: #{tpu_custom_call.1} parent=19 // pred_check_branch
          %158 = sbr.rel (%p156) target = $region28
        $region27: #{tpu_custom_call.1} parent=19 // pred_region
          %s159 = smul.u32 2, %s20
          %p160 = scmp.lt.s32.totalorder %s19, 1
          %s161 = scalar_select %p160, %s19, 1
          %p162 = scmp.lt.s32.totalorder %s159, 1
          %s163 = scalar_select %p162, %s159, 1
          %s164 = smul.addr %s161, 2
          %s165 = sadd.s32 %s163, %s164
          %s166 = smul.addr %s165, 4
          %s167 = scalar_lea.vmem %s2, %s166
          %s168 = smul.u32 2, %s20
        $region28: #{tpu_custom_call.1} parent=19 // pred_fallthru
          _
      $region20: #{tpu_custom_call.1} parent=5 // pred_fallthru
        _
      %p169 = scmp.le.s32.totalorder 1, %s12
      %p170 = scmp.lt.s32.totalorder %s12, 3
      %p171 = pnand %p169, %p170
      %p172 = pneg %p171
      // Predicated region
      $region29: #{tpu_custom_call.1} parent=5 // pred_check
        _
      $region30: #{tpu_custom_call.1} parent=5 // pred_check_branch
        %174 = sbr.rel (%p171) target = $region32
      $region31: #{tpu_custom_call.1} parent=5 // pred_region
        %s175 = ssub.s32 %s12, 1
        %p176 = scmp.lt.s32.totalorder %s21, 1
        %s177 = scalar_select %p176, %s21, 1
        %s178 = smul.addr %s177, 8
        %s179 = scalar_lea.vmem %s0, %s178
        %p180 = pneg %p50
        %p181 = pneg %p47
        %p182 = pneg %p71
        %p183 = pneg %p68
        %s184 = smul.u32 2, %s22
        %p185 = scmp.lt.s32.totalorder %s21, 1
        %s186 = scalar_select %p185, %s21, 1
        %p187 = scmp.lt.s32.totalorder %s184, 1
        %s188 = scalar_select %p187, %s184, 1
        %s189 = smul.addr %s186, 2
        %s190 = sadd.s32 %s188, %s189
        %s191 = smul.addr %s190, 4
        %s192 = scalar_lea.vmem %s2, %s191
        %p193 = pneg %p99
        %p194 = pneg %p96
        %p195 = pneg %p127
        %p196 = pneg %p124
        %s197 = sand.u32 %s114, 1
        %s198 = scalar_lea.sflag [#allocation3], %s197
        %s199 = sand.u32 %s114, 1
        %s200 = smul.addr %s199, 16
        %s201 = scalar_lea.vmem [#allocation2], %s200
        %p202 = scmp.lt.s32.totalorder %s21, 1
        %s203 = scalar_select %p202, %s21, 1
        %s204 = smul.addr %s203, 8
        %s205 = scalar_lea.vmem %s0, %s204
        %s206 = smul.u32 2, %s22
        %p207 = scmp.lt.s32.totalorder %s21, 1
        %s208 = scalar_select %p207, %s21, 1
        %p209 = scmp.lt.s32.totalorder %s206, 1
        %s210 = scalar_select %p209, %s206, 1
        %s211 = smul.addr %s208, 2
        %s212 = sadd.s32 %s210, %s211
        %s213 = smul.addr %s212, 4
        %s214 = scalar_lea.vmem %s2, %s213
        %s215 = smul.u32 2, %s22
        %s216 = smul.u32 2, %s22
        %v217 = vld [vmem:[%s205] sm:$0xff]
        %v218 = vld [vmem:[%s214] sm:$0xff]
        %v219 = vld [vmem:[%s1] sm:$0xff]
        %221 = vset.pattern.permute.xlu0 0
        %222 = vperm.xlu0 %221, %v219
        %v223 = vpop.permute.xlu0 %222
        %226 = vst [vmem:[#allocation1] ss:$2 sm:$0xff] %v218
        %v227 = vld.sshfl [vmem:[#allocation1] sm:$0xff pattern:$0x75316420]
        %v228 = vld.sshfl [vmem:[#allocation1 + $0x8] sm:$0xff pattern:$0x75316420]
        %vm229 = vcmask 31744
        %v231 = vsel %vm229, %v217, 0
        %vm233 = vcmask 1043456
        %v234 = vsel %vm233, %v227, 0
        %v236 = vsel %vm233, %v228, 0
        %238 = vmatpush.msra.mxu0 0.0
        %239 = vmatpush.msra.mxu0 0.0
        %240 = vmatpush.msra.mxu0 0.0
        %241 = vmatpush.msra.mxu0 0.0
        %242 = vmatpush.msra.mxu0 0.0
        %243 = vmatpush.msra.mxu0 0.0
        %244 = vmatpush.msra.mxu0 0.0
        %245 = vmatpush.msra.mxu0 0.0
        %246 = vmatpush.msra.mxu0 0.0
        %247 = vmatpush.msra.mxu0 0.0
        %248 = vmatpush.msra.mxu0 0.0
        %249 = vmatpush.msra.mxu0 0.0
        %250 = vmatpush.msra.mxu0 0.0
        %251 = vmatpush.msra.mxu0 0.0
        %252 = vmatpush.msra.mxu0 0.0
        %253 = vmatpush.msra.mxu0 %v234
        %254 = vmatmul.f32.gmra.mxu0 %v231
        %v255 = vpop.f32.mrf.mxu0
        %v256 = vadd.f32 %v223, %v255
        %257 = vdwg.mxu0
        %258 = vmatpush.msra.mxu0 0.0
        %259 = vmatpush.msra.mxu0 0.0
        %260 = vmatpush.msra.mxu0 0.0
        %261 = vmatpush.msra.mxu0 0.0
        %262 = vmatpush.msra.mxu0 0.0
        %263 = vmatpush.msra.mxu0 0.0
        %264 = vmatpush.msra.mxu0 0.0
        %265 = vmatpush.msra.mxu0 0.0
        %266 = vmatpush.msra.mxu0 0.0
        %267 = vmatpush.msra.mxu0 0.0
        %268 = vmatpush.msra.mxu0 0.0
        %269 = vmatpush.msra.mxu0 0.0
        %270 = vmatpush.msra.mxu0 0.0
        %271 = vmatpush.msra.mxu0 0.0
        %272 = vmatpush.msra.mxu0 0.0
        %273 = vmatpush.msra.mxu0 %v236
        %274 = vmatmul.f32.gmra.mxu0 %v231
        %v275 = vpop.f32.mrf.mxu0
        %v276 = vadd.f32 %v223, %v275
        %277 = vdwg.mxu0
        %278 = vst [vmem:[%s201] sm:$0xff] %v256
        %279 = vst [vmem:[%s201 + $0x8] sm:$0xff] %v276
        %s280 = sand.u32 %s114, 1
        %s281 = scalar_lea.sflag [#allocation3], %s280
        %s282 = sand.u32 %s114, 1
        %s283 = smul.addr %s282, 16
        %s284 = scalar_lea.vmem [#allocation2], %s283
        // Predicated region
        $region33: #{tpu_custom_call.1} parent=31 // pred_check
          %p285 = pneg %p124
        $region34: #{tpu_custom_call.1} parent=31 // pred_check_branch
          %287 = sbr.rel (%p285) target = $region36
        $region35: #{tpu_custom_call.1} parent=31 // pred_region
          %s288 = smul.u32 2, %s22
          %290 = vsyncadd %s281, 0
          %s291 = smul.addr %s21, 2
          %s292 = sadd.s32 %s288, %s291
          %s293 = smul.addr %s292, 8
          %s294 = scalar_lea.hbm %s3, %s293
          %s296 = sshll.u32 %s284, 4
          %s297 = int_to_ptr.vmem [resolvable:$true] %s296
          %s298 = sshll.u32 %s294, 4
          %s299 = int_to_ptr.hbm [resolvable:$true] %s298
          %301 = dma.vmem_to_hbm [thread:$0]  %s297, 256, %s299, %s281
        $region36: #{tpu_custom_call.1} parent=31 // pred_fallthru
          _
      $region32: #{tpu_custom_call.1} parent=5 // pred_fallthru
        _
      %p302 = scmp.le.s32.totalorder 2, %s12
      // Predicated region
      $region37: #{tpu_custom_call.1} parent=5 // pred_check
        %p303 = pneg %p302
      $region38: #{tpu_custom_call.1} parent=5 // pred_check_branch
        %305 = sbr.rel (%p303) target = $region40
      $region39: #{tpu_custom_call.1} parent=5 // pred_region
        %s306 = ssub.s32 %s12, 2
        // Predicated region
        $region41: #{tpu_custom_call.1} parent=39 // pred_check
          %p307 = pneg %p130
        $region42: #{tpu_custom_call.1} parent=39 // pred_check_branch
          %309 = sbr.rel (%p307) target = $region44
        $region43: #{tpu_custom_call.1} parent=39 // pred_region
          %s310 = sand.u32 %s115, 1
          %s311 = scalar_lea.sflag [#allocation3], %s310
          %s312 = sand.u32 %s115, 1
          %s313 = smul.addr %s312, 16
          %s314 = scalar_lea.vmem [#allocation2], %s313
          %316 = dma.done %s311, 256
        $region44: #{tpu_custom_call.1} parent=39 // pred_fallthru
          _
      $region40: #{tpu_custom_call.1} parent=5 // pred_fallthru
        _
    $region6: #{tpu_custom_call.1} parent=1 // loop_footer
      %s16 = sadd.s32 1, %s12
    $region7: #{tpu_custom_call.1} parent=1 // loop_footer_branch
      %11 = sbr.rel target = $region3
    $region8: #{tpu_custom_call.1} parent=1 // loop_exit
      _
    %317 = vsyncpa [#allocation3], 1
    %s318 = scalar_lea.sflag [#allocation3], 1
    %319 = vsyncpa %s318, 1

</llo_original>
